<compile_context>
chip_gen: v5e
topology: v5e:2x2
jax: 0.10.0
libtpu: 0.0.40
codegen_flags: <defaults>
</compile_context>

<pallas_src>
import math

import numpy as np
import jax
import jax.numpy as jnp
from jax import lax
from jax.experimental import pallas as pl
from jax.experimental.pallas import tpu as pltpu


def _r2c_split_kernel(re_in_ref, im_in_ref, re_out_ref, im_out_ref):
    # Memory-bound tile copy; the cast to f32 is free filler on the VPU.
    re_out_ref[...] = re_in_ref[...].astype(jnp.float32)
    im_out_ref[...] = im_in_ref[...].astype(jnp.float32)


def _ceil_div(a, b):
    return -(-a // b)


def _vmem_budget():
    """(vmem_limit_bytes, target_block_bytes) gated on TPU generation."""
    phys = 64 << 20                       # conservative default (v7x: 64 MiB)
    try:
        phys = int(pltpu.get_tpu_info().vmem_capacity_bytes)
    except Exception:                     # query unavailable -> stay conservative
        pass
    if phys >= (100 << 20):               # v5e / v6e: 128 MiB physical VMEM
        return 96 << 20, 8 << 20
    return 44 << 20, 4 << 20              # v7x: 64 MiB physical VMEM


def _pick_tiles(M, K, sub, wide_itemsize, target_block_bytes):
    """Lane-dense tiles: TK = largest multiple-of-128 divisor of K, big blocks."""
    # Largest lane tile that still leaves room for one sublane group of rows.
    max_tk = max(128, (target_block_bytes // (sub * wide_itemsize)) // 128 * 128)
    if K <= max_tk:
        TK = K                            # fully contiguous per-row slabs
    else:
        TK = 128
        for d in range(128, max_tk + 1, 128):
            if K % d == 0:
                TK = d
    # Row tile: fill the block-byte target, rounded to the dtype sublane tile.
    tm = max(sub, (target_block_bytes // (TK * wide_itemsize)) // sub * sub)
    TM = M if tm >= M else max(sub, (tm // sub) * sub)

    grid_m, grid_k = _ceil_div(M, TM), K // TK

    # v7x megacore: never leave a 1-step grid when it can be split.
    if grid_m * grid_k == 1:
        if M >= 2 * sub:
            TM = max(sub, _ceil_div(_ceil_div(M, sub), 2) * sub)
        elif TK % 256 == 0:
            TK //= 2
        grid_m, grid_k = _ceil_div(M, TM), K // TK

    # Bias small grids toward an even total step count (2 TCs share the grid).
    if (grid_m * grid_k) % 2 == 1 and grid_m * grid_k < 8 and TM > sub and M > sub:
        TM = max(sub, _ceil_div(_ceil_div(M, sub), 2 * grid_m) * sub)
        grid_m = _ceil_div(M, TM)

    return TM, TK, grid_m, grid_k


def real2complex(x, i, *, planar=False):
    """Pallas equivalent of Real2complexLayer(i).forward.

    Returns complex64 with shape = x.shape minus axis i.  With planar=True the
    planar (re, im) float32 pair is returned instead, skipping the final XLA
    interleave pass (TPU has no native complex math path anyway).
    """
    ndim = x.ndim
    ax = i % ndim
    shape = x.shape
    P = shape[ax]
    assert P >= 2, "pair axis must hold at least (real, imag)"
    out_shape = shape[:ax] + shape[ax + 1:]

    M = math.prod(shape[:ax])              # leading dims  -> rows (sublanes)
    K = math.prod(shape[ax + 1:])          # trailing dims -> lanes (lane-dense)
    itemsize = x.dtype.itemsize

    if K % 128 != 0 or M == 0 or K == 0:
        # TODO(synk): trailing extent cannot be made lane-dense (K not a
        # multiple of 128); for this pure-copy op the fused XLA slice+complex
        # is already a single HBM pass, so fall back instead of emitting a
        # masked-store Pallas kernel.
        re = jnp.take(x, 0, axis=ax).astype(jnp.float32)
        im = jnp.take(x, 1, axis=ax).astype(jnp.float32)
        return (re, im) if planar else lax.complex(re, im)

    sub = {4: 8, 2: 16, 1: 32}.get(itemsize, 8)    # dtype sublane tile
    wide = max(4, itemsize)                        # budget on the wider of in/out dtype
    vmem_limit, target_block_bytes = _vmem_budget()
    TM, TK, grid_m, grid_k = _pick_tiles(M, K, sub, wide, target_block_bytes)
    imag_blk_off = K // TK                 # imag plane starts at block column K/TK

    # Free (contiguous) reshape: row-major layout puts plane p of row m at
    # columns [p*K, (p+1)*K).  No data movement.
    x2 = x.reshape(M, P * K)

    # Pure-DMA call: 2 plane reads (input dtype) + 2 f32 plane writes.
    bytes_accessed = int(2 * M * K * itemsize + 2 * M * K * 4)

    re, im = pl.pallas_call(
        _r2c_split_kernel,
        out_shape=(
            jax.ShapeDtypeStruct((M, K), jnp.float32),
            jax.ShapeDtypeStruct((M, K), jnp.float32),
        ),
        grid=(grid_m, grid_k),
        in_specs=[
            # Real plane: columns [k*TK, (k+1)*TK) within [0, K).
            pl.BlockSpec((TM, TK), lambda m, k: (m, k)),
            # Imag plane: same array, columns offset by K.
            pl.BlockSpec((TM, TK), lambda m, k: (m, k + imag_blk_off)),
        ],
        out_specs=(
            pl.BlockSpec((TM, TK), lambda m, k: (m, k)),
            pl.BlockSpec((TM, TK), lambda m, k: (m, k)),
        ),
        compiler_params=pltpu.CompilerParams(
            dimension_semantics=("parallel", "parallel"),
            vmem_limit_bytes=vmem_limit,
        ),
        cost_estimate=pl.CostEstimate(
            flops=0, transcendentals=0, bytes_accessed=bytes_accessed),
    )(x2, x2)

    re = re.reshape(out_shape)
    im = im.reshape(out_shape)
    if planar:
        return re, im
    # TODO(synk): no zero-copy f32->complex64 reinterpret exists on TPU/XLA, so
    # the interleave is one fused XLA pass over the planar kernel outputs.
    return lax.complex(re, im)


if __name__ == "__main__":
    key = jax.random.PRNGKey(0)

    # NCHW input; channel axis (i=1) holds the (real, imag) pair in its first
    # two slots (extra channels are ignored, matching the PyTorch module).
    B, C, H, W = 2, 4, 16, 16
    x = jax.random.normal(key, (B, C, H, W), dtype=jnp.float32)
    out = jax.block_until_ready(real2complex(x, 1))
    ref = jnp.take(x, 0, axis=1) + 1j * jnp.take(x, 1, axis=1)
    assert out.shape == ref.shape == (B, H, W), (out.shape, ref.shape)
    assert out.dtype == jnp.complex64, out.dtype
    np.testing.assert_allclose(np.asarray(out), np.asarray(ref),
                               rtol=1e-6, atol=1e-6)

    # Multi-row case exercising row tiling and the grid-parity heuristic.
    x2 = jax.random.normal(jax.random.PRNGKey(1), (32, 2, 8, 64), dtype=jnp.float32)
    out2 = jax.block_until_ready(real2complex(x2, 1))
    ref2 = jnp.take(x2, 0, axis=1) + 1j * jnp.take(x2, 1, axis=1)
    np.testing.assert_allclose(np.asarray(out2), np.asarray(ref2),
                               rtol=1e-6, atol=1e-6)

    # bf16 input: the upcast to f32 is fused into the kernel body.
    x3 = jax.random.normal(jax.random.PRNGKey(2), (2, 2, 16, 128), dtype=jnp.bfloat16)
    out3 = jax.block_until_ready(real2complex(x3, 1))
    ref3 = lax.complex(jnp.take(x3, 0, axis=1).astype(jnp.float32),
                       jnp.take(x3, 1, axis=1).astype(jnp.float32))
    np.testing.assert_allclose(np.asarray(out3), np.asarray(ref3), rtol=0, atol=0)

    # Non-lane-aligned trailing extent -> fused XLA fallback path.
    x4 = jax.random.normal(jax.random.PRNGKey(3), (2, 3, 5, 7), dtype=jnp.float32)
    out4 = jax.block_until_ready(real2complex(x4, 1))
    ref4 = jnp.take(x4, 0, axis=1) + 1j * jnp.take(x4, 1, axis=1)
    np.testing.assert_allclose(np.asarray(out4), np.asarray(ref4),
                               rtol=1e-6, atol=1e-6)

    print("KERNEL_OK")
</pallas_src>

<mosaic_0001>
module attributes {stable_mosaic.version = 11 : i64} {
  func.func @_r2c_split_kernel(%arg0: i32, %arg1: i32, %arg2: memref<2x128xf32, #tpu.memory_space<vmem>>, %arg3: memref<2x128xf32, #tpu.memory_space<vmem>>, %arg4: memref<2x128xf32, #tpu.memory_space<vmem>>, %arg5: memref<2x128xf32, #tpu.memory_space<vmem>>) attributes {dimension_semantics = [#tpu.dimension_semantics<parallel>, #tpu.dimension_semantics<parallel>], iteration_bounds = array<i64: 1, 2>, scalar_prefetch = 0 : i64, scratch_operands = 0 : i64, tpu.core_type = #tpu.core_type<tc>, window_params = [{transform_indices = @transform_0, window_bounds = array<i64: 2, 128>}, {transform_indices = @transform_1, window_bounds = array<i64: 2, 128>}, {transform_indices = @transform_2, window_bounds = array<i64: 2, 128>}, {transform_indices = @transform_3, window_bounds = array<i64: 2, 128>}]} {
    %c0 = arith.constant 0 : index
    %c0_0 = arith.constant 0 : index
    %0 = vector.load %arg2[%c0, %c0_0] : memref<2x128xf32, #tpu.memory_space<vmem>>, vector<2x128xf32>
    %c0_1 = arith.constant 0 : index
    %c0_2 = arith.constant 0 : index
    %1 = vector.load %arg4[%c0_1, %c0_2] : memref<2x128xf32, #tpu.memory_space<vmem>>, vector<2x128xf32>
    tpu.vector_store %arg4[%c0_1, %c0_2], %0 {strides = array<i32>} : memref<2x128xf32, #tpu.memory_space<vmem>>, vector<2x128xf32>,
    %c0_3 = arith.constant 0 : index
    %c0_4 = arith.constant 0 : index
    %2 = vector.load %arg3[%c0_3, %c0_4] : memref<2x128xf32, #tpu.memory_space<vmem>>, vector<2x128xf32>
    %c0_5 = arith.constant 0 : index
    %c0_6 = arith.constant 0 : index
    %3 = vector.load %arg5[%c0_5, %c0_6] : memref<2x128xf32, #tpu.memory_space<vmem>>, vector<2x128xf32>
    tpu.vector_store %arg5[%c0_5, %c0_6], %2 {strides = array<i32>} : memref<2x128xf32, #tpu.memory_space<vmem>>, vector<2x128xf32>,
    return
  }
  func.func @transform_0(%arg0: i32, %arg1: i32) -> (i32, i32) {
    %c0_i32 = arith.constant 0 : i32
    return %arg0, %arg1 : i32, i32
  }
  func.func @transform_1(%arg0: i32, %arg1: i32) -> (i32, i32) {
    %c2_i32 = arith.constant 2 : i32
    %0 = arith.addi %arg1, %c2_i32 : i32
    %c0_i32 = arith.constant 0 : i32
    return %arg0, %0 : i32, i32
  }
  func.func @transform_2(%arg0: i32, %arg1: i32) -> (i32, i32) {
    %c0_i32 = arith.constant 0 : i32
    return %arg0, %arg1 : i32, i32
  }
  func.func @transform_3(%arg0: i32, %arg1: i32) -> (i32, i32) {
    %c0_i32 = arith.constant 0 : i32
    return %arg0, %arg1 : i32, i32
  }
}

</mosaic_0001>

<llo_original>
// kernel: tpu_custom_call.1
$region0: #{tpu_custom_call.1}
  #allocation0 [shape = 'u32[]', space=smem, size = 0x4, offset = 0x4, fixed_abs, tag = 'smem constant byte address 0x4 - core index']
  #allocation1 [shape = 'u32[72,128]{1,0:T(1,128)}', space=vmem, size = 0x9000, scoped, tag = 'internal scratch']
  %s0 = inlined_call_operand.hbm [shape: f32[2,1024], index: 0, kind: input, shape index: {}]
  %s1 = inlined_call_operand.hbm [shape: f32[2,1024], index: 1, kind: input, shape index: {}]
  %s2 = inlined_call_operand.hbm [shape: f32[2,256], index: 2, kind: output, shape index: {0}]
  %s3 = inlined_call_operand.hbm [shape: f32[2,256], index: 3, kind: output, shape index: {1}]
  %4 = xla_tuple %s2, %s3
  %s5 = sld [smem:[#allocation0]]
  $region57: #{tpu_custom_call.1} parent=0
    _
  %s7 = ssub.s32 1, %s5
  %s8 = scalar_select 0, %s7, %s5
  $region1: #{tpu_custom_call.1} parent=0
    #allocation2 [shape = 'u8[2048]{0}', space=vmem, size = 0x800, scoped, tag = 'input window, operand 0']
    #allocation3 [shape = 's32[2]{0}', space=sflag, size = 0x8, scoped, tag = 'scoped memory for tpu_custom_call.1']
    #allocation4 [shape = 's32[2]{0}', space=sflag, size = 0x8, scoped, tag = 'scoped memory for tpu_custom_call.1']
    #allocation5 [shape = 'u8[2048]{0}', space=vmem, size = 0x800, scoped, tag = 'input window, operand 1']
    #allocation6 [shape = 's32[2]{0}', space=sflag, size = 0x8, scoped, tag = 'scoped memory for tpu_custom_call.1']
    #allocation7 [shape = 'u8[2048]{0}', space=vmem, size = 0x800, scoped, tag = 'output window, operand 0']
    #allocation8 [shape = 'u8[2048]{0}', space=vmem, size = 0x800, scoped, tag = 'output window, operand 1']
    #allocation9 [shape = 's32[2]{0}', space=sflag, size = 0x8, scoped, tag = 'scoped memory for tpu_custom_call.1']
    %9 = vsyncpa [#allocation3], 0
    %s10 = scalar_lea.sflag [#allocation3], 1
    %11 = vsyncpa %s10, 0
    %12 = vsyncpa [#allocation6], 0
    %s13 = scalar_lea.sflag [#allocation6], 1
    %14 = vsyncpa %s13, 0
    %15 = vsyncpa [#allocation4], 0
    %s16 = scalar_lea.sflag [#allocation4], 1
    %17 = vsyncpa %s16, 0
    %18 = vsyncpa [#allocation9], 0
    %s19 = scalar_lea.sflag [#allocation9], 1
    %20 = vsyncpa %s19, 0
    loop: start=0, step=1, limit=4
    $region2: #{tpu_custom_call.1} parent=1 // loop_pre_header
      _
    $region3: #{tpu_custom_call.1} parent=1 // loop_header
      %s22 = sphi 0, %s26
      %p23 = scmp.ge.s32.totalorder %s22, 4
      %s29 = sphi 0, %s41
      %s30 = sphi 0, %s37
      %s31 = sphi 0, %s29
      %s32 = sphi 0, %s30
      %s33 = sphi 0, %s31
      %s34 = sphi 0, %s32
      %s46 = sphi 0, %s48
      %s49 = sphi 0, %s46
      %s50 = sphi 0, %s49
      %s66 = sphi 0, %s50
      %s76 = sphi 0, %s78
      %s79 = sphi 0, %s76
      %s80 = sphi 0, %s79
      %s96 = sphi 0, %s80
      %s104 = sphi 0, %s106
      %s107 = sphi 0, %s104
      %s108 = sphi 0, %s107
      %s124 = sphi 0, %s108
      %s132 = sphi 0, %s134
      %s135 = sphi 0, %s132
      %s136 = sphi 0, %s135
      %s152 = sphi 0, %s136
    $region4: #{tpu_custom_call.1} parent=1 // loop_header_branch
      %25 = sbr.rel (%p23) target = $region8
    $region5: #{tpu_custom_call.1} parent=1 // loop_body
      %s27 = ssub.s32 %s22, 1
      %s28 = ssub.s32 %s22, 2
      %s35 = sadd.s32 1, %s30
      %p36 = scmp.ge.s32.totalorder %s35, 2
      %s37 = scalar_select %p36, 0, %s35
      %s38 = sadd.s32 1, %s29
      %s39 = scalar_select %p36, %s38, %s29
      %p40 = scmp.ge.s32.totalorder %s39, 1
      %s41 = scalar_select %p40, 0, %s39
      %s42 = ssub.s32 %s29, %s41
      %s43 = ssub.s32 %s30, %s37
      %s44 = sor.u32 %s42, %s43
      %p45 = scmp.eq.s32.totalorder %s44, 0
      %s47 = sadd.s32 %s46, 1
      %s48 = scalar_select %p45, %s46, %s47
      %p51 = pneg %p45
      %p52 = scmp.eq.s32.totalorder %s22, 1
      %p53 = por %p51, %p52
      %p54 = scmp.ne.s32.totalorder %s46, %s49
      %p55 = scmp.eq.s32.totalorder %s22, 0
      %p56 = por %p54, %p55
      %p57 = scmp.ne.s32.totalorder %s46, %s49
      %p58 = scmp.eq.s32.totalorder %s27, 1
      %p59 = por %p57, %p58
      %p60 = scmp.ne.s32.totalorder %s49, %s50
      %p61 = scmp.eq.s32.totalorder %s27, 0
      %p62 = por %p60, %p61
      %p63 = scmp.ne.s32.totalorder %s49, %s50
      %p64 = scmp.eq.s32.totalorder %s28, 1
      %p65 = por %p63, %p64
      %p67 = scmp.ne.s32.totalorder %s50, %s66
      %p68 = scmp.eq.s32.totalorder %s28, 0
      %p69 = por %p67, %p68
      %s70 = sadd.s32 %s30, 2
      %s71 = sadd.s32 %s37, 2
      %s72 = ssub.s32 %s29, %s41
      %s73 = ssub.s32 %s70, %s71
      %s74 = sor.u32 %s72, %s73
      %p75 = scmp.eq.s32.totalorder %s74, 0
      %s77 = sadd.s32 %s76, 1
      %s78 = scalar_select %p75, %s76, %s77
      %p81 = pneg %p75
      %p82 = scmp.eq.s32.totalorder %s22, 1
      %p83 = por %p81, %p82
      %p84 = scmp.ne.s32.totalorder %s76, %s79
      %p85 = scmp.eq.s32.totalorder %s22, 0
      %p86 = por %p84, %p85
      %p87 = scmp.ne.s32.totalorder %s76, %s79
      %p88 = scmp.eq.s32.totalorder %s27, 1
      %p89 = por %p87, %p88
      %p90 = scmp.ne.s32.totalorder %s79, %s80
      %p91 = scmp.eq.s32.totalorder %s27, 0
      %p92 = por %p90, %p91
      %p93 = scmp.ne.s32.totalorder %s79, %s80
      %p94 = scmp.eq.s32.totalorder %s28, 1
      %p95 = por %p93, %p94
      %p97 = scmp.ne.s32.totalorder %s80, %s96
      %p98 = scmp.eq.s32.totalorder %s28, 0
      %p99 = por %p97, %p98
      %s100 = ssub.s32 %s29, %s41
      %s101 = ssub.s32 %s30, %s37
      %s102 = sor.u32 %s100, %s101
      %p103 = scmp.eq.s32.totalorder %s102, 0
      %s105 = sadd.s32 %s104, 1
      %s106 = scalar_select %p103, %s104, %s105
      %p109 = pneg %p103
      %p110 = scmp.eq.s32.totalorder %s22, 1
      %p111 = por %p109, %p110
      %p112 = scmp.ne.s32.totalorder %s104, %s107
      %p113 = scmp.eq.s32.totalorder %s22, 0
      %p114 = por %p112, %p113
      %p115 = scmp.ne.s32.totalorder %s104, %s107
      %p116 = scmp.eq.s32.totalorder %s27, 1
      %p117 = por %p115, %p116
      %p118 = scmp.ne.s32.totalorder %s107, %s108
      %p119 = scmp.eq.s32.totalorder %s27, 0
      %p120 = por %p118, %p119
      %p121 = scmp.ne.s32.totalorder %s107, %s108
      %p122 = scmp.eq.s32.totalorder %s28, 1
      %p123 = por %p121, %p122
      %p125 = scmp.ne.s32.totalorder %s108, %s124
      %p126 = scmp.eq.s32.totalorder %s28, 0
      %p127 = por %p125, %p126
      %s128 = ssub.s32 %s29, %s41
      %s129 = ssub.s32 %s30, %s37
      %s130 = sor.u32 %s128, %s129
      %p131 = scmp.eq.s32.totalorder %s130, 0
      %s133 = sadd.s32 %s132, 1
      %s134 = scalar_select %p131, %s132, %s133
      %p137 = pneg %p131
      %p138 = scmp.eq.s32.totalorder %s22, 1
      %p139 = por %p137, %p138
      %p140 = scmp.ne.s32.totalorder %s132, %s135
      %p141 = scmp.eq.s32.totalorder %s22, 0
      %p142 = por %p140, %p141
      %p143 = scmp.ne.s32.totalorder %s132, %s135
      %p144 = scmp.eq.s32.totalorder %s27, 1
      %p145 = por %p143, %p144
      %p146 = scmp.ne.s32.totalorder %s135, %s136
      %p147 = scmp.eq.s32.totalorder %s27, 0
      %p148 = por %p146, %p147
      %p149 = scmp.ne.s32.totalorder %s135, %s136
      %p150 = scmp.eq.s32.totalorder %s28, 1
      %p151 = por %p149, %p150
      %p153 = scmp.ne.s32.totalorder %s136, %s152
      %p154 = scmp.eq.s32.totalorder %s28, 0
      %p155 = por %p153, %p154
      %p156 = scmp.le.s32.totalorder 1, %s22
      %p157 = scmp.lt.s32.totalorder %s22, 3
      %p158 = pnand %p156, %p157
      %p159 = pneg %p158
      // Predicated region
      $region9: #{tpu_custom_call.1} parent=5 // pred_check
        _
      $region10: #{tpu_custom_call.1} parent=5 // pred_check_branch
        %161 = sbr.rel (%p158) target = $region12
      $region11: #{tpu_custom_call.1} parent=5 // pred_region
        %s162 = ssub.s32 %s22, 1
      $region12: #{tpu_custom_call.1} parent=5 // pred_fallthru
        _
      %p163 = scmp.lt.s32.totalorder %s22, 2
      // Predicated region
      $region13: #{tpu_custom_call.1} parent=5 // pred_check
        %p164 = pneg %p163
      $region14: #{tpu_custom_call.1} parent=5 // pred_check_branch
        %166 = sbr.rel (%p164) target = $region16
      $region15: #{tpu_custom_call.1} parent=5 // pred_region
        // Predicated region
        $region17: #{tpu_custom_call.1} parent=15 // pred_check
          %p167 = pneg %p56
        $region18: #{tpu_custom_call.1} parent=15 // pred_check_branch
          %169 = sbr.rel (%p167) target = $region20
        $region19: #{tpu_custom_call.1} parent=15 // pred_region
          %s170 = sand.u32 %s46, 1
          %s171 = scalar_lea.sflag [#allocation3], %s170
          %s172 = sand.u32 %s46, 1
          %s173 = smul.addr %s172, 2
          %s174 = scalar_lea.vmem [#allocation2], %s173
          %176 = vsyncadd %s171, 0
          %s177 = smul.addr %s29, 8
          %s178 = sadd.s32 %s30, %s177
          %s179 = smul.addr %s178, 2
          %s180 = scalar_lea.hbm %s0, %s179
          %s182 = sshll.u32 %s180, 4
          %s183 = int_to_ptr.hbm [resolvable:$true] %s182
          %s184 = sshll.u32 %s174, 4
          %s185 = int_to_ptr.vmem [resolvable:$true] %s184
          %187 = dma.hbm_to_vmem [thread:$0]  %s183, 32, %s185, %s171
        $region20: #{tpu_custom_call.1} parent=15 // pred_fallthru
          _
        // Predicated region
        $region21: #{tpu_custom_call.1} parent=15 // pred_check
          %p188 = pneg %p86
        $region22: #{tpu_custom_call.1} parent=15 // pred_check_branch
          %190 = sbr.rel (%p188) target = $region24
        $region23: #{tpu_custom_call.1} parent=15 // pred_region
          %s191 = sand.u32 %s76, 1
          %s192 = scalar_lea.sflag [#allocation6], %s191
          %s193 = sand.u32 %s76, 1
          %s194 = smul.addr %s193, 2
          %s195 = scalar_lea.vmem [#allocation5], %s194
          %s196 = sadd.s32 %s30, 2
          %198 = vsyncadd %s192, 0
          %s199 = smul.addr %s29, 8
          %s200 = sadd.s32 %s196, %s199
          %s201 = smul.addr %s200, 2
          %s202 = scalar_lea.hbm %s1, %s201
          %s204 = sshll.u32 %s202, 4
          %s205 = int_to_ptr.hbm [resolvable:$true] %s204
          %s206 = sshll.u32 %s195, 4
          %s207 = int_to_ptr.vmem [resolvable:$true] %s206
          %209 = dma.hbm_to_vmem [thread:$0]  %s205, 32, %s207, %s192
        $region24: #{tpu_custom_call.1} parent=15 // pred_fallthru
          _
      $region16: #{tpu_custom_call.1} parent=5 // pred_fallthru
        _
      %p210 = scmp.le.s32.totalorder 1, %s22
      %p211 = scmp.lt.s32.totalorder %s22, 3
      %p212 = pnand %p210, %p211
      %p213 = pneg %p212
      // Predicated region
      $region25: #{tpu_custom_call.1} parent=5 // pred_check
        _
      $region26: #{tpu_custom_call.1} parent=5 // pred_check_branch
        %215 = sbr.rel (%p212) target = $region28
      $region27: #{tpu_custom_call.1} parent=5 // pred_region
        %s216 = ssub.s32 %s22, 1
        %s217 = sand.u32 %s49, 1
        %s218 = scalar_lea.sflag [#allocation3], %s217
        %s219 = sand.u32 %s49, 1
        %s220 = smul.addr %s219, 2
        %s221 = scalar_lea.vmem [#allocation2], %s220
        // Predicated region
        $region29: #{tpu_custom_call.1} parent=27 // pred_check
          %p222 = pneg %p62
        $region30: #{tpu_custom_call.1} parent=27 // pred_check_branch
          %224 = sbr.rel (%p222) target = $region32
        $region31: #{tpu_custom_call.1} parent=27 // pred_region
          %226 = dma.done %s218, 32
        $region32: #{tpu_custom_call.1} parent=27 // pred_fallthru
          _
        %s227 = sand.u32 %s79, 1
        %s228 = scalar_lea.sflag [#allocation6], %s227
        %s229 = sand.u32 %s79, 1
        %s230 = smul.addr %s229, 2
        %s231 = scalar_lea.vmem [#allocation5], %s230
        // Predicated region
        $region33: #{tpu_custom_call.1} parent=27 // pred_check
          %p232 = pneg %p92
        $region34: #{tpu_custom_call.1} parent=27 // pred_check_branch
          %234 = sbr.rel (%p232) target = $region36
        $region35: #{tpu_custom_call.1} parent=27 // pred_region
          %236 = dma.done %s228, 32
        $region36: #{tpu_custom_call.1} parent=27 // pred_fallthru
          _
        %s237 = sand.u32 %s49, 1
        %s238 = scalar_lea.sflag [#allocation3], %s237
        %s239 = sand.u32 %s49, 1
        %s240 = smul.addr %s239, 2
        %s241 = scalar_lea.vmem [#allocation2], %s240
        %p242 = pneg %p62
        %p243 = pneg %p59
        %s244 = sand.u32 %s79, 1
        %s245 = scalar_lea.sflag [#allocation6], %s244
        %s246 = sand.u32 %s79, 1
        %s247 = smul.addr %s246, 2
        %s248 = scalar_lea.vmem [#allocation5], %s247
        %p249 = pneg %p92
        %p250 = pneg %p89
        %p251 = pneg %p120
        %p252 = pneg %p117
        %s253 = sand.u32 %s107, 1
        %s254 = scalar_lea.sflag [#allocation4], %s253
        %s255 = sand.u32 %s107, 1
        %s256 = smul.addr %s255, 2
        %s257 = scalar_lea.vmem [#allocation7], %s256
        %p258 = pneg %p148
        %p259 = pneg %p145
        %s260 = sand.u32 %s135, 1
        %s261 = scalar_lea.sflag [#allocation9], %s260
        %s262 = sand.u32 %s135, 1
        %s263 = smul.addr %s262, 2
        %s264 = scalar_lea.vmem [#allocation8], %s263
        %s265 = sadd.s32 %s32, 2
        %v266 = vld [vmem:[%s221] sm:$0x3]
        %267 = vst [vmem:[%s257] sm:$0x3] %v266
        %v268 = vld [vmem:[%s231] sm:$0x3]
        %269 = vst [vmem:[%s264] sm:$0x3] %v268
        %s270 = sand.u32 %s107, 1
        %s271 = scalar_lea.sflag [#allocation4], %s270
        %s272 = sand.u32 %s107, 1
        %s273 = smul.addr %s272, 2
        %s274 = scalar_lea.vmem [#allocation7], %s273
        %s275 = sand.u32 %s135, 1
        %s276 = scalar_lea.sflag [#allocation9], %s275
        %s277 = sand.u32 %s135, 1
        %s278 = smul.addr %s277, 2
        %s279 = scalar_lea.vmem [#allocation8], %s278
        // Predicated region
        $region37: #{tpu_custom_call.1} parent=27 // pred_check
          %p280 = pneg %p117
        $region38: #{tpu_custom_call.1} parent=27 // pred_check_branch
          %282 = sbr.rel (%p280) target = $region40
        $region39: #{tpu_custom_call.1} parent=27 // pred_region
          %284 = vsyncadd %s271, 0
          %s285 = smul.addr %s31, 2
          %s286 = sadd.s32 %s32, %s285
          %s287 = smul.addr %s286, 2
          %s288 = scalar_lea.hbm %s2, %s287
          %s290 = sshll.u32 %s274, 4
          %s291 = int_to_ptr.vmem [resolvable:$true] %s290
          %s292 = sshll.u32 %s288, 4
          %s293 = int_to_ptr.hbm [resolvable:$true] %s292
          %295 = dma.vmem_to_hbm [thread:$0]  %s291, 32, %s293, %s271
        $region40: #{tpu_custom_call.1} parent=27 // pred_fallthru
          _
        // Predicated region
        $region41: #{tpu_custom_call.1} parent=27 // pred_check
          %p296 = pneg %p145
        $region42: #{tpu_custom_call.1} parent=27 // pred_check_branch
          %298 = sbr.rel (%p296) target = $region44
        $region43: #{tpu_custom_call.1} parent=27 // pred_region
          %300 = vsyncadd %s276, 0
          %s301 = smul.addr %s31, 2
          %s302 = sadd.s32 %s32, %s301
          %s303 = smul.addr %s302, 2
          %s304 = scalar_lea.hbm %s3, %s303
          %s306 = sshll.u32 %s279, 4
          %s307 = int_to_ptr.vmem [resolvable:$true] %s306
          %s308 = sshll.u32 %s304, 4
          %s309 = int_to_ptr.hbm [resolvable:$true] %s308
          %311 = dma.vmem_to_hbm [thread:$0]  %s307, 32, %s309, %s276
        $region44: #{tpu_custom_call.1} parent=27 // pred_fallthru
          _
      $region28: #{tpu_custom_call.1} parent=5 // pred_fallthru
        _
      %p312 = scmp.le.s32.totalorder 2, %s22
      // Predicated region
      $region45: #{tpu_custom_call.1} parent=5 // pred_check
        %p313 = pneg %p312
      $region46: #{tpu_custom_call.1} parent=5 // pred_check_branch
        %315 = sbr.rel (%p313) target = $region48
      $region47: #{tpu_custom_call.1} parent=5 // pred_region
        %s316 = ssub.s32 %s22, 2
        // Predicated region
        $region49: #{tpu_custom_call.1} parent=47 // pred_check
          %p317 = pneg %p123
        $region50: #{tpu_custom_call.1} parent=47 // pred_check_branch
          %319 = sbr.rel (%p317) target = $region52
        $region51: #{tpu_custom_call.1} parent=47 // pred_region
          %s320 = sand.u32 %s108, 1
          %s321 = scalar_lea.sflag [#allocation4], %s320
          %s322 = sand.u32 %s108, 1
          %s323 = smul.addr %s322, 2
          %s324 = scalar_lea.vmem [#allocation7], %s323
          %326 = dma.done %s321, 32
        $region52: #{tpu_custom_call.1} parent=47 // pred_fallthru
          _
        // Predicated region
        $region53: #{tpu_custom_call.1} parent=47 // pred_check
          %p327 = pneg %p151
        $region54: #{tpu_custom_call.1} parent=47 // pred_check_branch
          %329 = sbr.rel (%p327) target = $region56
        $region55: #{tpu_custom_call.1} parent=47 // pred_region
          %s330 = sand.u32 %s136, 1
          %s331 = scalar_lea.sflag [#allocation9], %s330
          %s332 = sand.u32 %s136, 1
          %s333 = smul.addr %s332, 2
          %s334 = scalar_lea.vmem [#allocation8], %s333
          %336 = dma.done %s331, 32
        $region56: #{tpu_custom_call.1} parent=47 // pred_fallthru
          _
      $region48: #{tpu_custom_call.1} parent=5 // pred_fallthru
        _
    $region6: #{tpu_custom_call.1} parent=1 // loop_footer
      %s26 = sadd.s32 1, %s22
    $region7: #{tpu_custom_call.1} parent=1 // loop_footer_branch
      %21 = sbr.rel target = $region3
    $region8: #{tpu_custom_call.1} parent=1 // loop_exit
      _
    %337 = vsyncpa [#allocation3], 1
    %s338 = scalar_lea.sflag [#allocation3], 1
    %339 = vsyncpa %s338, 1
    %340 = vsyncpa [#allocation6], 1
    %s341 = scalar_lea.sflag [#allocation6], 1
    %342 = vsyncpa %s341, 1
    %343 = vsyncpa [#allocation4], 1
    %s344 = scalar_lea.sflag [#allocation4], 1
    %345 = vsyncpa %s344, 1
    %346 = vsyncpa [#allocation9], 1
    %s347 = scalar_lea.sflag [#allocation9], 1
    %348 = vsyncpa %s347, 1

</llo_original>
